<compile_context>
chip_gen: v6e
topology: v6e:2x2x1
jax: 0.10.0
libtpu: 0.0.40
codegen_flags: <defaults>
</compile_context>

<pallas_src>
import functools

import jax
import jax.numpy as jnp
from jax.experimental import pallas as pl
from jax.experimental.pallas import tpu as pltpu

_LANE = 128
_SUBLANE = 8


def _round_up(x: int, m: int) -> int:
    return ((x + m - 1) // m) * m


# ---------------------------------------------------------------------------
# Kernel
# ---------------------------------------------------------------------------
def _make_mlp_kernel(num_layers: int):
    """Fused MLP kernel: refs = (x, w0, b0, w1, b1, ..., out)."""

    def kernel(*refs):
        x_ref = refs[0]
        o_ref = refs[-1]
        p = refs[1:-1]

        h = x_ref[...]
        if h.dtype != jnp.float32:          # trace-time gate
            h = h.astype(jnp.float32)
        for l in range(num_layers):
            w = p[2 * l][...]               # [in_pad, out_pad], resident, bf16
            b = p[2 * l + 1][...]           # [1, out_pad], f32
            if b.dtype != jnp.float32:
                b = b.astype(jnp.float32)
            # MXU in the weights' dtype (bf16), accumulate in f32.
            h = jnp.dot(h.astype(w.dtype), w,
                        preferred_element_type=jnp.float32) + b
            if l < num_layers - 1:
                h = jnp.maximum(h, 0.0)     # hidden ReLU (activation_fn)
            else:
                h = jnp.tanh(h)             # squash_output=True
        o_ref[...] = h.astype(o_ref.dtype)

    return kernel


# ---------------------------------------------------------------------------
# VMEM budget / tile planning
# ---------------------------------------------------------------------------
def _vmem_budget_bytes() -> int:
    """Generation-aware scoped-VMEM budget (half of physical, capped)."""
    try:
        cap = int(pltpu.get_tpu_info().vmem_capacity_bytes)
        # v5e/v6e (128 MiB) -> 64 MiB, v7x (64 MiB per TC) -> 32 MiB.
        return max(16 << 20, min(cap // 2, 96 << 20))
    except Exception:
        # Conservative fallback that fits every generation's physical VMEM.
        return 40 << 20


def _plan_tiles(B: int, state_dim: int, dims_pad, param_bytes: int, budget: int):
    """Pick (TB, grid_steps) under an honest VMEM accounting."""
    out_pad = dims_pad[-1]
    max_dim = max([state_dim] + list(dims_pad))
    # Per-batch-row VMEM: double-buffered obs tile + double-buffered out tile
    # + live f32 intermediates of the unrolled layer chain (h, its bf16 copy,
    # and the next h) -- counted conservatively at the widest layer.
    row_bytes = (2 * state_dim * 4) + (2 * out_pad * 4) + (3 * max_dim * 4)
    headroom = 2 << 20                      # Mosaic internal scratch headroom
    avail = budget - headroom - param_bytes
    if avail < _SUBLANE * row_bytes:
        # TODO(synk): add a K/N-tiled fallback (reduction axis + accumulator
        # scratch) for nets whose parameters do not fit resident in VMEM.
        raise ValueError(
            f"Actor parameters ({param_bytes / 2**20:.1f} MiB resident) do not "
            f"fit the VMEM budget ({budget / 2**20:.1f} MiB); no tiled fallback "
            f"implemented.")

    max_tb = min((avail // row_bytes) // _SUBLANE * _SUBLANE, 2048)
    max_tb = max(max_tb, _SUBLANE)

    b8 = _round_up(B, _SUBLANE)
    if b8 <= _SUBLANE:
        tb = _SUBLANE
    else:
        # >=2 grid steps so the v7x megacore can shard the "parallel" batch axis
        # across both TensorCores; pick the step count that minimizes batch
        # padding slack rather than snapping to a power of two.
        steps = max(pl.cdiv(b8, max_tb), 2)
        tb = _round_up(pl.cdiv(b8, steps), _SUBLANE)
        while tb > max_tb:
            steps += 1
            tb = _round_up(pl.cdiv(b8, steps), _SUBLANE)
    grid_n = pl.cdiv(b8, tb)
    return tb, grid_n


# ---------------------------------------------------------------------------
# Wrapper
# ---------------------------------------------------------------------------
@functools.partial(jax.jit, static_argnames=("action_dim", "single_buffer_params"))
def _actor_forward_jit(obs, flat_params, action_dim, single_buffer_params=True):
    num_layers = len(flat_params) // 2
    B, state_dim = obs.shape
    compute_dtype = jnp.bfloat16            # MXU operand dtype (f32 accumulate)

    # Zero-pad every layer's out-dim (hidden and final) to a multiple of 128
    # lanes; pad the next layer's in-dim (rows) to match. Numerically inert.
    params = []
    dims_pad = []
    prev_pad = state_dim
    for l in range(num_layers):
        w = flat_params[2 * l]
        b = flat_params[2 * l + 1].reshape(1, -1)
        in_d, out_d = w.shape
        out_p = _LANE * pl.cdiv(out_d, _LANE)
        w = jnp.pad(w, ((0, prev_pad - in_d), (0, out_p - out_d)))
        b = jnp.pad(b, ((0, 0), (0, out_p - out_d)))
        params += [w.astype(compute_dtype), b.astype(jnp.float32)]
        dims_pad.append(out_p)
        prev_pad = out_p
    out_pad = dims_pad[-1]

    # Resident parameter footprint (single buffer if Buffered(1) is honored).
    buf_factor = 1 if single_buffer_params else 2
    raw_param_bytes = sum(int(p_.size) * p_.dtype.itemsize for p_ in params)
    param_bytes = buf_factor * raw_param_bytes

    budget = _vmem_budget_bytes()
    TB, grid_n = _plan_tiles(B, state_dim, dims_pad, param_bytes, budget)
    B_pad = grid_n * TB
    obs_p = obs if B_pad == B else jnp.pad(obs, ((0, B_pad - B), (0, 0)))

    # obs/out tiles move per grid step; weights/biases use a constant index_map
    # (and a single buffer) so they are fetched once and stay resident in VMEM.
    in_specs = [pl.BlockSpec((TB, state_dim), lambda i: (i, 0))]
    for p_ in params:
        if single_buffer_params:
            in_specs.append(pl.BlockSpec(p_.shape, lambda i: (0, 0),
                                         pipeline_mode=pl.Buffered(1)))
        else:
            in_specs.append(pl.BlockSpec(p_.shape, lambda i: (0, 0)))
    out_specs = pl.BlockSpec((TB, out_pad), lambda i: (i, 0))

    flops = 0
    for l in range(num_layers):
        in_d, out_d = params[2 * l].shape
        flops += 2 * B_pad * in_d * out_d
    bytes_accessed = (int(obs_p.size) * obs_p.dtype.itemsize
                      + raw_param_bytes
                      + B_pad * out_pad * 4)
    cost = pl.CostEstimate(flops=flops,
                           transcendentals=B_pad * out_pad,   # final tanh
                           bytes_accessed=bytes_accessed)

    out = pl.pallas_call(
        _make_mlp_kernel(num_layers),
        out_shape=jax.ShapeDtypeStruct((B_pad, out_pad), jnp.float32),
        grid=(grid_n,),
        in_specs=in_specs,
        out_specs=out_specs,
        compiler_params=pltpu.CompilerParams(
            dimension_semantics=("parallel",),   # v7x: shard batch over 2 TCs
            vmem_limit_bytes=int(budget)),
        cost_estimate=cost,
    )(obs_p, *params)

    return out[:B, :action_dim]


_SINGLE_BUFFER_PARAMS_OK = True   # flipped off if pl.Buffered(1) is unsupported


def actor_forward(obs, flat_params, action_dim):
    """Runs the fused Actor MLP as a single batch-tiled Pallas kernel.

    obs:         [B, state_dim] float32
    flat_params: tuple (w0, b0, w1, b1, ...), wi: [in, out], bi: [1, out]
    """
    global _SINGLE_BUFFER_PARAMS_OK
    if _SINGLE_BUFFER_PARAMS_OK:
        try:
            return _actor_forward_jit(obs, flat_params, action_dim, True)
        except Exception:
            _SINGLE_BUFFER_PARAMS_OK = False   # fall back to default buffering
    return _actor_forward_jit(obs, flat_params, action_dim, False)


# ---------------------------------------------------------------------------
# Parameter init + pure-JAX reference
# ---------------------------------------------------------------------------
def init_actor_params(key, state_dim, net_arch, action_dim):
    """Deterministic parameter init (uniform, PyTorch-Linear-like fan_in bound)."""
    dims = [state_dim] + list(net_arch) + [action_dim]
    params = []
    for i in range(len(dims) - 1):
        fan_in, fan_out = dims[i], dims[i + 1]
        key, kw, kb = jax.random.split(key, 3)
        bound = 1.0 / jnp.sqrt(fan_in)
        w = jax.random.uniform(kw, (fan_in, fan_out), jnp.float32, -bound, bound)
        b = jax.random.uniform(kb, (1, fan_out), jnp.float32, -bound, bound)
        params += [w, b]
    return tuple(params)


def actor_forward_ref(obs, flat_params):
    """Pure-JAX f32 reference for correctness checking."""
    num_layers = len(flat_params) // 2
    h = obs
    for l in range(num_layers):
        w, b = flat_params[2 * l], flat_params[2 * l + 1]
        h = h @ w + b
        h = jnp.maximum(h, 0.0) if l < num_layers - 1 else jnp.tanh(h)
    return h


if __name__ == "__main__":
    # Small, module-consistent shapes.
    state_dim = 16       # features_dim (flatten feature extractor)
    net_arch = [32, 32]  # hidden layers
    action_dim = 4

    key = jax.random.PRNGKey(0)
    key, k_params = jax.random.split(key)
    params = init_actor_params(k_params, state_dim, net_arch, action_dim)

    ok = True
    # batch=2 exercises the single-step path; batch=64 exercises the >=2-step
    # (megacore-shardable) grid path.
    for batch in (2, 64):
        key, k_obs = jax.random.split(key)
        obs = jax.random.normal(k_obs, (batch, state_dim), jnp.float32)

        out = actor_forward(obs, params, action_dim)
        out = jax.block_until_ready(out)

        ref = actor_forward_ref(obs, params)
        assert out.shape == (batch, action_dim)
        # bf16 MXU operands with f32 accumulation: loose-but-meaningful tolerance
        # against the pure-f32 reference (tanh outputs are O(1)).
        if not jnp.allclose(out, ref, atol=3e-2, rtol=3e-2):
            ok = False
            print(f"mismatch at batch={batch}: "
                  f"max_abs_err={float(jnp.max(jnp.abs(out - ref))):.3e}")

    assert ok, "mismatch vs JAX reference"
    print("KERNEL_OK")
</pallas_src>

<mosaic_0001>
module attributes {stable_mosaic.version = 11 : i64} {
  func.func @kernel(%arg0: i32, %arg1: memref<8x16xf32, #tpu.memory_space<vmem>>, %arg2: memref<16x128xbf16, #tpu.memory_space<vmem>>, %arg3: memref<1x128xf32, #tpu.memory_space<vmem>>, %arg4: memref<128x128xbf16, #tpu.memory_space<vmem>>, %arg5: memref<1x128xf32, #tpu.memory_space<vmem>>, %arg6: memref<128x128xbf16, #tpu.memory_space<vmem>>, %arg7: memref<1x128xf32, #tpu.memory_space<vmem>>, %arg8: memref<8x128xf32, #tpu.memory_space<vmem>>) attributes {dimension_semantics = [#tpu.dimension_semantics<parallel>], iteration_bounds = array<i64: 1>, scalar_prefetch = 0 : i64, scratch_operands = 0 : i64, tpu.core_type = #tpu.core_type<tc>, window_params = [{transform_indices = @transform_0, window_bounds = array<i64: 8, 16>}, {pipeline_mode = #tpu.pipeline_mode<synchronous>, transform_indices = @transform_1, window_bounds = array<i64: 16, 128>}, {pipeline_mode = #tpu.pipeline_mode<synchronous>, transform_indices = @transform_2, window_bounds = array<i64: 1, 128>}, {pipeline_mode = #tpu.pipeline_mode<synchronous>, transform_indices = @transform_3, window_bounds = array<i64: 128, 128>}, {pipeline_mode = #tpu.pipeline_mode<synchronous>, transform_indices = @transform_4, window_bounds = array<i64: 1, 128>}, {pipeline_mode = #tpu.pipeline_mode<synchronous>, transform_indices = @transform_5, window_bounds = array<i64: 128, 128>}, {pipeline_mode = #tpu.pipeline_mode<synchronous>, transform_indices = @transform_6, window_bounds = array<i64: 1, 128>}, {transform_indices = @transform_7, window_bounds = array<i64: 8, 128>}]} {
    %c0 = arith.constant 0 : index
    %c0_0 = arith.constant 0 : index
    %0 = vector.load %arg1[%c0, %c0_0] : memref<8x16xf32, #tpu.memory_space<vmem>>, vector<8x16xf32>
    %c0_1 = arith.constant 0 : index
    %c0_2 = arith.constant 0 : index
    %1 = vector.load %arg2[%c0_1, %c0_2] : memref<16x128xbf16, #tpu.memory_space<vmem>>, vector<16x128xbf16>
    %c0_3 = arith.constant 0 : index
    %c0_4 = arith.constant 0 : index
    %2 = vector.load %arg3[%c0_3, %c0_4] : memref<1x128xf32, #tpu.memory_space<vmem>>, vector<1x128xf32>
    %3 = arith.truncf %0 : vector<8x16xf32> to vector<8x16xbf16>
    %cst = arith.constant dense<0.000000e+00> : vector<8x128xf32>
    %4 = tpu.matmul %3, %1, %cst {dimension_numbers = #tpu.dot_dimension_numbers<[1], [0], [0], [1], [0, 0, 1, 1], [], []>} : vector<8x16xbf16>, vector<16x128xbf16>, vector<8x128xf32> -> vector<8x128xf32>
    %5 = vector.broadcast %2 : vector<1x128xf32> to vector<8x128xf32>
    %6 = arith.addf %4, %5 : vector<8x128xf32>
    %cst_5 = arith.constant 0.000000e+00 : f32
    %7 = vector.broadcast %cst_5 : f32 to vector<8x128xf32>
    %8 = arith.maximumf %6, %7 : vector<8x128xf32>
    %c0_6 = arith.constant 0 : index
    %c0_7 = arith.constant 0 : index
    %9 = vector.load %arg4[%c0_6, %c0_7] : memref<128x128xbf16, #tpu.memory_space<vmem>>, vector<128x128xbf16>
    %c0_8 = arith.constant 0 : index
    %c0_9 = arith.constant 0 : index
    %10 = vector.load %arg5[%c0_8, %c0_9] : memref<1x128xf32, #tpu.memory_space<vmem>>, vector<1x128xf32>
    %11 = arith.truncf %8 : vector<8x128xf32> to vector<8x128xbf16>
    %cst_10 = arith.constant dense<0.000000e+00> : vector<8x128xf32>
    %12 = tpu.matmul %11, %9, %cst_10 {dimension_numbers = #tpu.dot_dimension_numbers<[1], [0], [0], [1], [0, 0, 1, 1], [], []>} : vector<8x128xbf16>, vector<128x128xbf16>, vector<8x128xf32> -> vector<8x128xf32>
    %13 = vector.broadcast %10 : vector<1x128xf32> to vector<8x128xf32>
    %14 = arith.addf %12, %13 : vector<8x128xf32>
    %cst_11 = arith.constant 0.000000e+00 : f32
    %15 = vector.broadcast %cst_11 : f32 to vector<8x128xf32>
    %16 = arith.maximumf %14, %15 : vector<8x128xf32>
    %c0_12 = arith.constant 0 : index
    %c0_13 = arith.constant 0 : index
    %17 = vector.load %arg6[%c0_12, %c0_13] : memref<128x128xbf16, #tpu.memory_space<vmem>>, vector<128x128xbf16>
    %c0_14 = arith.constant 0 : index
    %c0_15 = arith.constant 0 : index
    %18 = vector.load %arg7[%c0_14, %c0_15] : memref<1x128xf32, #tpu.memory_space<vmem>>, vector<1x128xf32>
    %19 = arith.truncf %16 : vector<8x128xf32> to vector<8x128xbf16>
    %cst_16 = arith.constant dense<0.000000e+00> : vector<8x128xf32>
    %20 = tpu.matmul %19, %17, %cst_16 {dimension_numbers = #tpu.dot_dimension_numbers<[1], [0], [0], [1], [0, 0, 1, 1], [], []>} : vector<8x128xbf16>, vector<128x128xbf16>, vector<8x128xf32> -> vector<8x128xf32>
    %21 = vector.broadcast %18 : vector<1x128xf32> to vector<8x128xf32>
    %22 = arith.addf %20, %21 : vector<8x128xf32>
    %23 = math.tanh %22 : vector<8x128xf32>
    %c0_17 = arith.constant 0 : index
    %c0_18 = arith.constant 0 : index
    %24 = vector.load %arg8[%c0_17, %c0_18] : memref<8x128xf32, #tpu.memory_space<vmem>>, vector<8x128xf32>
    tpu.vector_store %arg8[%c0_17, %c0_18], %23 {strides = array<i32>} : memref<8x128xf32, #tpu.memory_space<vmem>>, vector<8x128xf32>,
    return
  }
  func.func @transform_0(%arg0: i32) -> (i32, i32) {
    %c0_i32 = arith.constant 0 : i32
    %c0_i32_0 = arith.constant 0 : i32
    return %arg0, %c0_i32 : i32, i32
  }
  func.func @transform_1(%arg0: i32) -> (i32, i32) {
    %c0_i32 = arith.constant 0 : i32
    %c0_i32_0 = arith.constant 0 : i32
    %c0_i32_1 = arith.constant 0 : i32
    return %c0_i32, %c0_i32_0 : i32, i32
  }
  func.func @transform_2(%arg0: i32) -> (i32, i32) {
    %c0_i32 = arith.constant 0 : i32
    %c0_i32_0 = arith.constant 0 : i32
    %c0_i32_1 = arith.constant 0 : i32
    return %c0_i32, %c0_i32_0 : i32, i32
  }
  func.func @transform_3(%arg0: i32) -> (i32, i32) {
    %c0_i32 = arith.constant 0 : i32
    %c0_i32_0 = arith.constant 0 : i32
    %c0_i32_1 = arith.constant 0 : i32
    return %c0_i32, %c0_i32_0 : i32, i32
  }
  func.func @transform_4(%arg0: i32) -> (i32, i32) {
    %c0_i32 = arith.constant 0 : i32
    %c0_i32_0 = arith.constant 0 : i32
    %c0_i32_1 = arith.constant 0 : i32
    return %c0_i32, %c0_i32_0 : i32, i32
  }
  func.func @transform_5(%arg0: i32) -> (i32, i32) {
    %c0_i32 = arith.constant 0 : i32
    %c0_i32_0 = arith.constant 0 : i32
    %c0_i32_1 = arith.constant 0 : i32
    return %c0_i32, %c0_i32_0 : i32, i32
  }
  func.func @transform_6(%arg0: i32) -> (i32, i32) {
    %c0_i32 = arith.constant 0 : i32
    %c0_i32_0 = arith.constant 0 : i32
    %c0_i32_1 = arith.constant 0 : i32
    return %c0_i32, %c0_i32_0 : i32, i32
  }
  func.func @transform_7(%arg0: i32) -> (i32, i32) {
    %c0_i32 = arith.constant 0 : i32
    %c0_i32_0 = arith.constant 0 : i32
    return %arg0, %c0_i32 : i32, i32
  }
}

module attributes {stable_mosaic.version = 11 : i64} {
  func.func @kernel(%arg0: i32, %arg1: memref<8x16xf32, #tpu.memory_space<vmem>>, %arg2: memref<16x128xbf16, #tpu.memory_space<vmem>>, %arg3: memref<1x128xf32, #tpu.memory_space<vmem>>, %arg4: memref<128x128xbf16, #tpu.memory_space<vmem>>, %arg5: memref<1x128xf32, #tpu.memory_space<vmem>>, %arg6: memref<128x128xbf16, #tpu.memory_space<vmem>>, %arg7: memref<1x128xf32, #tpu.memory_space<vmem>>, %arg8: memref<8x128xf32, #tpu.memory_space<vmem>>) attributes {dimension_semantics = [#tpu.dimension_semantics<parallel>], iteration_bounds = array<i64: 1>, scalar_prefetch = 0 : i64, scratch_operands = 0 : i64, tpu.core_type = #tpu.core_type<tc>, window_params = [{transform_indices = @transform_0, window_bounds = array<i64: 8, 16>}, {pipeline_mode = #tpu.pipeline_mode<synchronous>, transform_indices = @transform_1, window_bounds = array<i64: 16, 128>}, {pipeline_mode = #tpu.pipeline_mode<synchronous>, transform_indices = @transform_2, window_bounds = array<i64: 1, 128>}, {pipeline_mode = #tpu.pipeline_mode<synchronous>, transform_indices = @transform_3, window_bounds = array<i64: 128, 128>}, {pipeline_mode = #tpu.pipeline_mode<synchronous>, transform_indices = @transform_4, window_bounds = array<i64: 1, 128>}, {pipeline_mode = #tpu.pipeline_mode<synchronous>, transform_indices = @transform_5, window_bounds = array<i64: 128, 128>}, {pipeline_mode = #tpu.pipeline_mode<synchronous>, transform_indices = @transform_6, window_bounds = array<i64: 1, 128>}, {transform_indices = @transform_7, window_bounds = array<i64: 8, 128>}]} {
    %c0 = arith.constant 0 : index
    %c0_0 = arith.constant 0 : index
    %0 = vector.load %arg1[%c0, %c0_0] : memref<8x16xf32, #tpu.memory_space<vmem>>, vector<8x16xf32>
    %c0_1 = arith.constant 0 : index
    %c0_2 = arith.constant 0 : index
    %1 = vector.load %arg2[%c0_1, %c0_2] : memref<16x128xbf16, #tpu.memory_space<vmem>>, vector<16x128xbf16>
    %c0_3 = arith.constant 0 : index
    %c0_4 = arith.constant 0 : index
    %2 = vector.load %arg3[%c0_3, %c0_4] : memref<1x128xf32, #tpu.memory_space<vmem>>, vector<1x128xf32>
    %3 = arith.truncf %0 : vector<8x16xf32> to vector<8x16xbf16>
    %cst = arith.constant dense<0.000000e+00> : vector<8x128xf32>
    %4 = tpu.matmul %3, %1, %cst {dimension_numbers = #tpu.dot_dimension_numbers<[1], [0], [0], [1], [0, 0, 1, 1], [], []>} : vector<8x16xbf16>, vector<16x128xbf16>, vector<8x128xf32> -> vector<8x128xf32>
    %5 = vector.broadcast %2 : vector<1x128xf32> to vector<8x128xf32>
    %6 = arith.addf %4, %5 : vector<8x128xf32>
    %cst_5 = arith.constant 0.000000e+00 : f32
    %7 = vector.broadcast %cst_5 : f32 to vector<8x128xf32>
    %8 = arith.maximumf %6, %7 : vector<8x128xf32>
    %c0_6 = arith.constant 0 : index
    %c0_7 = arith.constant 0 : index
    %9 = vector.load %arg4[%c0_6, %c0_7] : memref<128x128xbf16, #tpu.memory_space<vmem>>, vector<128x128xbf16>
    %c0_8 = arith.constant 0 : index
    %c0_9 = arith.constant 0 : index
    %10 = vector.load %arg5[%c0_8, %c0_9] : memref<1x128xf32, #tpu.memory_space<vmem>>, vector<1x128xf32>
    %11 = arith.truncf %8 : vector<8x128xf32> to vector<8x128xbf16>
    %cst_10 = arith.constant dense<0.000000e+00> : vector<8x128xf32>
    %12 = tpu.matmul %11, %9, %cst_10 {dimension_numbers = #tpu.dot_dimension_numbers<[1], [0], [0], [1], [0, 0, 1, 1], [], []>} : vector<8x128xbf16>, vector<128x128xbf16>, vector<8x128xf32> -> vector<8x128xf32>
    %13 = vector.broadcast %10 : vector<1x128xf32> to vector<8x128xf32>
    %14 = arith.addf %12, %13 : vector<8x128xf32>
    %cst_11 = arith.constant 0.000000e+00 : f32
    %15 = vector.broadcast %cst_11 : f32 to vector<8x128xf32>
    %16 = arith.maximumf %14, %15 : vector<8x128xf32>
    %c0_12 = arith.constant 0 : index
    %c0_13 = arith.constant 0 : index
    %17 = vector.load %arg6[%c0_12, %c0_13] : memref<128x128xbf16, #tpu.memory_space<vmem>>, vector<128x128xbf16>
    %c0_14 = arith.constant 0 : index
    %c0_15 = arith.constant 0 : index
    %18 = vector.load %arg7[%c0_14, %c0_15] : memref<1x128xf32, #tpu.memory_space<vmem>>, vector<1x128xf32>
    %19 = arith.truncf %16 : vector<8x128xf32> to vector<8x128xbf16>
    %cst_16 = arith.constant dense<0.000000e+00> : vector<8x128xf32>
    %20 = tpu.matmul %19, %17, %cst_16 {dimension_numbers = #tpu.dot_dimension_numbers<[1], [0], [0], [1], [0, 0, 1, 1], [], []>} : vector<8x128xbf16>, vector<128x128xbf16>, vector<8x128xf32> -> vector<8x128xf32>
    %21 = vector.broadcast %18 : vector<1x128xf32> to vector<8x128xf32>
    %22 = arith.addf %20, %21 : vector<8x128xf32>
    %23 = math.tanh %22 : vector<8x128xf32>
    %c0_17 = arith.constant 0 : index
    %c0_18 = arith.constant 0 : index
    %24 = vector.load %arg8[%c0_17, %c0_18] : memref<8x128xf32, #tpu.memory_space<vmem>>, vector<8x128xf32>
    tpu.vector_store %arg8[%c0_17, %c0_18], %23 {strides = array<i32>} : memref<8x128xf32, #tpu.memory_space<vmem>>, vector<8x128xf32>,
    return
  }
  func.func @transform_0(%arg0: i32) -> (i32, i32) {
    %c0_i32 = arith.constant 0 : i32
    %c0_i32_0 = arith.constant 0 : i32
    return %arg0, %c0_i32 : i32, i32
  }
  func.func @transform_1(%arg0: i32) -> (i32, i32) {
    %c0_i32 = arith.constant 0 : i32
    %c0_i32_0 = arith.constant 0 : i32
    %c0_i32_1 = arith.constant 0 : i32
    return %c0_i32, %c0_i32_0 : i32, i32
  }
  func.func @transform_2(%arg0: i32) -> (i32, i32) {
    %c0_i32 = arith.constant 0 : i32
    %c0_i32_0 = arith.constant 0 : i32
    %c0_i32_1 = arith.constant 0 : i32
    return %c0_i32, %c0_i32_0 : i32, i32
  }
  func.func @transform_3(%arg0: i32) -> (i32, i32) {
    %c0_i32 = arith.constant 0 : i32
    %c0_i32_0 = arith.constant 0 : i32
    %c0_i32_1 = arith.constant 0 : i32
    return %c0_i32, %c0_i32_0 : i32, i32
  }
  func.func @transform_4(%arg0: i32) -> (i32, i32) {
    %c0_i32 = arith.constant 0 : i32
    %c0_i32_0 = arith.constant 0 : i32
    %c0_i32_1 = arith.constant 0 : i32
    return %c0_i32, %c0_i32_0 : i32, i32
  }
  func.func @transform_5(%arg0: i32) -> (i32, i32) {
    %c0_i32 = arith.constant 0 : i32
    %c0_i32_0 = arith.constant 0 : i32
    %c0_i32_1 = arith.constant 0 : i32
    return %c0_i32, %c0_i32_0 : i32, i32
  }
  func.func @transform_6(%arg0: i32) -> (i32, i32) {
    %c0_i32 = arith.constant 0 : i32
    %c0_i32_0 = arith.constant 0 : i32
    %c0_i32_1 = arith.constant 0 : i32
    return %c0_i32, %c0_i32_0 : i32, i32
  }
  func.func @transform_7(%arg0: i32) -> (i32, i32) {
    %c0_i32 = arith.constant 0 : i32
    %c0_i32_0 = arith.constant 0 : i32
    return %arg0, %c0_i32 : i32, i32
  }
}

</mosaic_0001>

<llo_original>
// kernel: _actor_forward_jit.1
$region0: #{_actor_forward_jit.1}
  #allocation0 [shape = 'u32[]', space=smem, size = 0x4, offset = 0x4, fixed_abs, tag = 'smem constant byte address 0x4 - core index']
  #allocation1 [shape = 'u32[144,128]{1,0:T(1,128)}', space=vmem, size = 0x12000, scoped, tag = 'internal scratch']
  %s0 = inlined_call_operand.vmem [shape: f32[8,16], index: 0, kind: input, shape index: {}]
  %s1 = inlined_call_operand.vmem [shape: bf16[16,128], index: 1, kind: input, shape index: {}]
  %s2 = inlined_call_operand.vmem [shape: f32[1,128], index: 2, kind: input, shape index: {}]
  %s3 = inlined_call_operand.vmem [shape: bf16[128,128], index: 3, kind: input, shape index: {}]
  %s4 = inlined_call_operand.vmem [shape: f32[1,128], index: 4, kind: input, shape index: {}]
  %s5 = inlined_call_operand.vmem [shape: bf16[128,128], index: 5, kind: input, shape index: {}]
  %s6 = inlined_call_operand.vmem [shape: f32[1,128], index: 6, kind: input, shape index: {}]
  %s7 = inlined_call_operand.vmem [shape: f32[8,128], index: 7, kind: output, shape index: {}]
  %s8 = sld [smem:[#allocation0]]
  $region38: #{_actor_forward_jit.1} parent=0
    _
  %s10 = ssub.s32 1, %s8
  %s11 = scalar_select 0, %s10, %s8
  // Predicated region
  $region2: #{_actor_forward_jit.1} parent=0 // pred_check
    _
  $region3: #{_actor_forward_jit.1} parent=0 // pred_check_branch
    %13 = sbr.rel (0) target = $region5
  $region4: #{_actor_forward_jit.1} parent=0 // pred_region
    _
  $region5: #{_actor_forward_jit.1} parent=0 // pred_fallthru
    _
  // Predicated region
  $region6: #{_actor_forward_jit.1} parent=0 // pred_check
    _
  $region7: #{_actor_forward_jit.1} parent=0 // pred_check_branch
    %15 = sbr.rel (0) target = $region9
  $region8: #{_actor_forward_jit.1} parent=0 // pred_region
    _
  $region9: #{_actor_forward_jit.1} parent=0 // pred_fallthru
    _
  // Predicated region
  $region10: #{_actor_forward_jit.1} parent=0 // pred_check
    _
  $region11: #{_actor_forward_jit.1} parent=0 // pred_check_branch
    %17 = sbr.rel (0) target = $region13
  $region12: #{_actor_forward_jit.1} parent=0 // pred_region
    _
  $region13: #{_actor_forward_jit.1} parent=0 // pred_fallthru
    _
  // Predicated region
  $region14: #{_actor_forward_jit.1} parent=0 // pred_check
    _
  $region15: #{_actor_forward_jit.1} parent=0 // pred_check_branch
    %19 = sbr.rel (0) target = $region17
  $region16: #{_actor_forward_jit.1} parent=0 // pred_region
    _
  $region17: #{_actor_forward_jit.1} parent=0 // pred_fallthru
    _
  // Predicated region
  $region18: #{_actor_forward_jit.1} parent=0 // pred_check
    _
  $region19: #{_actor_forward_jit.1} parent=0 // pred_check_branch
    %21 = sbr.rel (0) target = $region21
  $region20: #{_actor_forward_jit.1} parent=0 // pred_region
    _
  $region21: #{_actor_forward_jit.1} parent=0 // pred_fallthru
    _
  // Predicated region
  $region22: #{_actor_forward_jit.1} parent=0 // pred_check
    _
  $region23: #{_actor_forward_jit.1} parent=0 // pred_check_branch
    %23 = sbr.rel (0) target = $region25
  $region24: #{_actor_forward_jit.1} parent=0 // pred_region
    _
  $region25: #{_actor_forward_jit.1} parent=0 // pred_fallthru
    _
  // Predicated region
  $region26: #{_actor_forward_jit.1} parent=0 // pred_check
    _
  $region27: #{_actor_forward_jit.1} parent=0 // pred_check_branch
    %25 = sbr.rel (0) target = $region29
  $region28: #{_actor_forward_jit.1} parent=0 // pred_region
    _
  $region29: #{_actor_forward_jit.1} parent=0 // pred_fallthru
    _
  %v27 = vld [vmem:[%s0] sm:$0xff]
  %v28 = vld [vmem:[%s1] sm:$0xf]
  %v29 = vld [vmem:[%s1 + $0x4] sm:$0xf]
  %v30 = vld [vmem:[%s2] sm:$0x1]
  %v31 = vpack.c.bf16 %v27, %v27
  %v33 = vlaneseq
  %v34 = vshrl.u32 %v33, 7
  %v35 = vsub.s32 0, %v34
  %v36 = vrot.slane %v30, %v35
  %v40 = vunpack.c.l.b16 %v28
  %v41 = vunpack.c.l.b16 %v29
  %v42 = vpack.c.b16 %v41, %v40
  %vm44 = vcmask 130048
  %v46 = vsel %vm44, %v31, 0
  %48 = vmatprep.subr.bf16.mxu0 0
  %49 = vmatpush1.bf16.msra.mxu0 0
  %50 = vmatprep.subr.bf16.mxu0 0
  %51 = vmatpush1.bf16.msra.mxu0 0
  %52 = vmatprep.subr.bf16.mxu0 0
  %53 = vmatpush1.bf16.msra.mxu0 0
  %54 = vmatprep.subr.bf16.mxu0 0
  %55 = vmatpush1.bf16.msra.mxu0 0
  %56 = vmatprep.subr.bf16.mxu0 0
  %57 = vmatpush1.bf16.msra.mxu0 0
  %58 = vmatprep.subr.bf16.mxu0 0
  %59 = vmatpush1.bf16.msra.mxu0 0
  %60 = vmatprep.subr.bf16.mxu0 0
  %61 = vmatpush1.bf16.msra.mxu0 0
  %62 = vmatprep.subr.bf16.mxu0 0
  %63 = vmatpush1.bf16.msra.mxu0 %v42
  %64 = vmatprep.subr.bf16.mxu0 0
  %65 = vmatpush2.bf16.msra.mxu0 0
  %66 = vmatprep.subr.bf16.mxu0 0
  %67 = vmatpush2.bf16.msra.mxu0 0
  %68 = vmatprep.subr.bf16.mxu0 0
  %69 = vmatpush2.bf16.msra.mxu0 0
  %70 = vmatprep.subr.bf16.mxu0 0
  %71 = vmatpush2.bf16.msra.mxu0 0
  %72 = vmatprep.subr.bf16.mxu0 0
  %73 = vmatpush2.bf16.msra.mxu0 0
  %74 = vmatprep.subr.bf16.mxu0 0
  %75 = vmatpush2.bf16.msra.mxu0 0
  %76 = vmatprep.subr.bf16.mxu0 0
  %77 = vmatpush2.bf16.msra.mxu0 0
  %78 = vmatprep.subr.bf16.mxu0 0
  %79 = vmatpush2.bf16.msra.mxu0 0
  %80 = vmatprep.mubr.bf16.mxu0 0
  %81 = vmatmul.mubr.bf16.gmra.mxu0 %v46
  %v82 = vpop.f32.mrf.mxu0
  %v83 = vadd.f32 %v36, %v82
  %v84 = vpop.f32.mrf.mxu0
  %v85 = vpop.f32.mrf.mxu0
  %v86 = vpop.f32.mrf.mxu0
  %87 = vdwg.mxu0
  %v88 = vmax.f32 %v83, 0.0
  %v89 = vld [vmem:[%s3] sm:$0xf]
  %v90 = vld [vmem:[%s3 + $0x4] sm:$0xf]
  %v91 = vld [vmem:[%s3 + $0x8] sm:$0xf]
  %v92 = vld [vmem:[%s3 + $0xc] sm:$0xf]
  %v93 = vld [vmem:[%s3 + $0x10] sm:$0xf]
  %v94 = vld [vmem:[%s3 + $0x14] sm:$0xf]
  %v95 = vld [vmem:[%s3 + $0x18] sm:$0xf]
  %v96 = vld [vmem:[%s3 + $0x1c] sm:$0xf]
  %v97 = vld [vmem:[%s3 + $0x20] sm:$0xf]
  %v98 = vld [vmem:[%s3 + $0x24] sm:$0xf]
  %v99 = vld [vmem:[%s3 + $0x28] sm:$0xf]
  %v100 = vld [vmem:[%s3 + $0x2c] sm:$0xf]
  %v101 = vld [vmem:[%s3 + $0x30] sm:$0xf]
  %v102 = vld [vmem:[%s3 + $0x34] sm:$0xf]
  %v103 = vld [vmem:[%s3 + $0x38] sm:$0xf]
  %v104 = vld [vmem:[%s3 + $0x3c] sm:$0xf]
  %v105 = vld [vmem:[%s4] sm:$0x1]
  %v106 = vpack.c.bf16 %v88, %v88
  %v108 = vlaneseq
  %v109 = vshrl.u32 %v108, 7
  %v110 = vsub.s32 0, %v109
  %v111 = vrot.slane %v105, %v110
  %v129 = vunpack.c.l.b16 %v89
  %v130 = vunpack.c.l.b16 %v90
  %v131 = vunpack.c.l.b16 %v91
  %v132 = vunpack.c.l.b16 %v92
  %v133 = vunpack.c.l.b16 %v93
  %v134 = vunpack.c.l.b16 %v94
  %v135 = vunpack.c.l.b16 %v95
  %v136 = vunpack.c.l.b16 %v96
  %v137 = vunpack.c.l.b16 %v97
  %v138 = vunpack.c.l.b16 %v98
  %v139 = vunpack.c.l.b16 %v99
  %v140 = vunpack.c.l.b16 %v100
  %v141 = vunpack.c.l.b16 %v101
  %v142 = vunpack.c.l.b16 %v102
  %v143 = vunpack.c.l.b16 %v103
  %v144 = vunpack.c.l.b16 %v104
  %v145 = vpack.c.b16 %v130, %v129
  %v146 = vpack.c.b16 %v132, %v131
  %v147 = vpack.c.b16 %v134, %v133
  %v148 = vpack.c.b16 %v136, %v135
  %v149 = vpack.c.b16 %v138, %v137
  %v150 = vpack.c.b16 %v140, %v139
  %v151 = vpack.c.b16 %v142, %v141
  %v152 = vpack.c.b16 %v144, %v143
  %161 = vmatprep.subr.bf16.mxu0 0
  %162 = vmatpush1.bf16.msra.mxu0 %v152
  %163 = vmatprep.subr.bf16.mxu0 0
  %164 = vmatpush1.bf16.msra.mxu0 %v151
  %165 = vmatprep.subr.bf16.mxu0 0
  %166 = vmatpush1.bf16.msra.mxu0 %v150
  %167 = vmatprep.subr.bf16.mxu0 0
  %168 = vmatpush1.bf16.msra.mxu0 %v149
  %169 = vmatprep.subr.bf16.mxu0 0
  %170 = vmatpush1.bf16.msra.mxu0 %v148
  %171 = vmatprep.subr.bf16.mxu0 0
  %172 = vmatpush1.bf16.msra.mxu0 %v147
  %173 = vmatprep.subr.bf16.mxu0 0
  %174 = vmatpush1.bf16.msra.mxu0 %v146
  %175 = vmatprep.subr.bf16.mxu0 0
  %176 = vmatpush1.bf16.msra.mxu0 %v145
  %177 = vmatprep.subr.bf16.mxu0 0
  %178 = vmatpush2.bf16.msra.mxu0 0
  %179 = vmatprep.subr.bf16.mxu0 0
  %180 = vmatpush2.bf16.msra.mxu0 0
  %181 = vmatprep.subr.bf16.mxu0 0
  %182 = vmatpush2.bf16.msra.mxu0 0
  %183 = vmatprep.subr.bf16.mxu0 0
  %184 = vmatpush2.bf16.msra.mxu0 0
  %185 = vmatprep.subr.bf16.mxu0 0
  %186 = vmatpush2.bf16.msra.mxu0 0
  %187 = vmatprep.subr.bf16.mxu0 0
  %188 = vmatpush2.bf16.msra.mxu0 0
  %189 = vmatprep.subr.bf16.mxu0 0
  %190 = vmatpush2.bf16.msra.mxu0 0
  %191 = vmatprep.subr.bf16.mxu0 0
  %192 = vmatpush2.bf16.msra.mxu0 0
  %193 = vmatprep.mubr.bf16.mxu0 0
  %194 = vmatmul.mubr.bf16.gmra.mxu0 %v106
  %v195 = vpop.f32.mrf.mxu0
  %v196 = vadd.f32 %v111, %v195
  %v197 = vpop.f32.mrf.mxu0
  %v198 = vpop.f32.mrf.mxu0
  %v199 = vpop.f32.mrf.mxu0
  %200 = vdwg.mxu0
  %v201 = vmax.f32 %v196, 0.0
  %v202 = vld [vmem:[%s5] sm:$0xf]
  %v203 = vld [vmem:[%s5 + $0x4] sm:$0xf]
  %v204 = vld [vmem:[%s5 + $0x8] sm:$0xf]
  %v205 = vld [vmem:[%s5 + $0xc] sm:$0xf]
  %v206 = vld [vmem:[%s5 + $0x10] sm:$0xf]
  %v207 = vld [vmem:[%s5 + $0x14] sm:$0xf]
  %v208 = vld [vmem:[%s5 + $0x18] sm:$0xf]
  %v209 = vld [vmem:[%s5 + $0x1c] sm:$0xf]
  %v210 = vld [vmem:[%s5 + $0x20] sm:$0xf]
  %v211 = vld [vmem:[%s5 + $0x24] sm:$0xf]
  %v212 = vld [vmem:[%s5 + $0x28] sm:$0xf]
  %v213 = vld [vmem:[%s5 + $0x2c] sm:$0xf]
  %v214 = vld [vmem:[%s5 + $0x30] sm:$0xf]
  %v215 = vld [vmem:[%s5 + $0x34] sm:$0xf]
  %v216 = vld [vmem:[%s5 + $0x38] sm:$0xf]
  %v217 = vld [vmem:[%s5 + $0x3c] sm:$0xf]
  %v218 = vld [vmem:[%s6] sm:$0x1]
  %v219 = vpack.c.bf16 %v201, %v201
  %v221 = vlaneseq
  %v222 = vshrl.u32 %v221, 7
  %v223 = vsub.s32 0, %v222
  %v224 = vrot.slane %v218, %v223
  %v242 = vunpack.c.l.b16 %v202
  %v243 = vunpack.c.l.b16 %v203
  %v244 = vunpack.c.l.b16 %v204
  %v245 = vunpack.c.l.b16 %v205
  %v246 = vunpack.c.l.b16 %v206
  %v247 = vunpack.c.l.b16 %v207
  %v248 = vunpack.c.l.b16 %v208
  %v249 = vunpack.c.l.b16 %v209
  %v250 = vunpack.c.l.b16 %v210
  %v251 = vunpack.c.l.b16 %v211
  %v252 = vunpack.c.l.b16 %v212
  %v253 = vunpack.c.l.b16 %v213
  %v254 = vunpack.c.l.b16 %v214
  %v255 = vunpack.c.l.b16 %v215
  %v256 = vunpack.c.l.b16 %v216
  %v257 = vunpack.c.l.b16 %v217
  %v258 = vpack.c.b16 %v243, %v242
  %v259 = vpack.c.b16 %v245, %v244
  %v260 = vpack.c.b16 %v247, %v246
  %v261 = vpack.c.b16 %v249, %v248
  %v262 = vpack.c.b16 %v251, %v250
  %v263 = vpack.c.b16 %v253, %v252
  %v264 = vpack.c.b16 %v255, %v254
  %v265 = vpack.c.b16 %v257, %v256
  %274 = vmatprep.subr.bf16.mxu0 0
  %275 = vmatpush1.bf16.msra.mxu0 %v265
  %276 = vmatprep.subr.bf16.mxu0 0
  %277 = vmatpush1.bf16.msra.mxu0 %v264
  %278 = vmatprep.subr.bf16.mxu0 0
  %279 = vmatpush1.bf16.msra.mxu0 %v263
  %280 = vmatprep.subr.bf16.mxu0 0
  %281 = vmatpush1.bf16.msra.mxu0 %v262
  %282 = vmatprep.subr.bf16.mxu0 0
  %283 = vmatpush1.bf16.msra.mxu0 %v261
  %284 = vmatprep.subr.bf16.mxu0 0
  %285 = vmatpush1.bf16.msra.mxu0 %v260
  %286 = vmatprep.subr.bf16.mxu0 0
  %287 = vmatpush1.bf16.msra.mxu0 %v259
  %288 = vmatprep.subr.bf16.mxu0 0
  %289 = vmatpush1.bf16.msra.mxu0 %v258
  %290 = vmatprep.subr.bf16.mxu0 0
  %291 = vmatpush2.bf16.msra.mxu0 0
  %292 = vmatprep.subr.bf16.mxu0 0
  %293 = vmatpush2.bf16.msra.mxu0 0
  %294 = vmatprep.subr.bf16.mxu0 0
  %295 = vmatpush2.bf16.msra.mxu0 0
  %296 = vmatprep.subr.bf16.mxu0 0
  %297 = vmatpush2.bf16.msra.mxu0 0
  %298 = vmatprep.subr.bf16.mxu0 0
  %299 = vmatpush2.bf16.msra.mxu0 0
  %300 = vmatprep.subr.bf16.mxu0 0
  %301 = vmatpush2.bf16.msra.mxu0 0
  %302 = vmatprep.subr.bf16.mxu0 0
  %303 = vmatpush2.bf16.msra.mxu0 0
  %304 = vmatprep.subr.bf16.mxu0 0
  %305 = vmatpush2.bf16.msra.mxu0 0
  %306 = vmatprep.mubr.bf16.mxu0 0
  %307 = vmatmul.mubr.bf16.gmra.mxu0 %v219
  %v308 = vpop.f32.mrf.mxu0
  %v309 = vadd.f32 %v224, %v308
  %v310 = vpop.f32.mrf.mxu0
  %v311 = vpop.f32.mrf.mxu0
  %v312 = vpop.f32.mrf.mxu0
  %313 = vdwg.mxu0
  %v314 = vtanh.pop %v309
  %315 = vst [vmem:[%s7] sm:$0xff] %v314
  // Predicated region
  $region30: #{_actor_forward_jit.1} parent=0 // pred_check
    _
  $region31: #{_actor_forward_jit.1} parent=0 // pred_check_branch
    %317 = sbr.rel (0) target = $region33
  $region32: #{_actor_forward_jit.1} parent=0 // pred_region
    _
  $region33: #{_actor_forward_jit.1} parent=0 // pred_fallthru
    _
  // Predicated region
  $region34: #{_actor_forward_jit.1} parent=0 // pred_check
    _
  $region35: #{_actor_forward_jit.1} parent=0 // pred_check_branch
    %319 = sbr.rel (0) target = $region37
  $region36: #{_actor_forward_jit.1} parent=0 // pred_region
    _
  $region37: #{_actor_forward_jit.1} parent=0 // pred_fallthru
    _

// kernel: _actor_forward_jit.1
$region0: #{_actor_forward_jit.1}
  #allocation0 [shape = 'u32[]', space=smem, size = 0x4, offset = 0x4, fixed_abs, tag = 'smem constant byte address 0x4 - core index']
  #allocation1 [shape = 'u32[144,128]{1,0:T(1,128)}', space=vmem, size = 0x12000, scoped, tag = 'internal scratch']
  %s0 = inlined_call_operand.vmem [shape: f32[8,16], index: 0, kind: input, shape index: {}]
  %s1 = inlined_call_operand.vmem [shape: bf16[16,128], index: 1, kind: input, shape index: {}]
  %s2 = inlined_call_operand.vmem [shape: f32[1,128], index: 2, kind: input, shape index: {}]
  %s3 = inlined_call_operand.vmem [shape: bf16[128,128], index: 3, kind: input, shape index: {}]
  %s4 = inlined_call_operand.vmem [shape: f32[1,128], index: 4, kind: input, shape index: {}]
  %s5 = inlined_call_operand.vmem [shape: bf16[128,128], index: 5, kind: input, shape index: {}]
  %s6 = inlined_call_operand.vmem [shape: f32[1,128], index: 6, kind: input, shape index: {}]
  %s7 = inlined_call_operand.vmem [shape: f32[8,128], index: 7, kind: output, shape index: {}]
  %s8 = sld [smem:[#allocation0]]
  $region38: #{_actor_forward_jit.1} parent=0
    _
  %s10 = ssub.s32 1, %s8
  %s11 = scalar_select 0, %s10, %s8
  // Predicated region
  $region2: #{_actor_forward_jit.1} parent=0 // pred_check
    _
  $region3: #{_actor_forward_jit.1} parent=0 // pred_check_branch
    %13 = sbr.rel (0) target = $region5
  $region4: #{_actor_forward_jit.1} parent=0 // pred_region
    _
  $region5: #{_actor_forward_jit.1} parent=0 // pred_fallthru
    _
  // Predicated region
  $region6: #{_actor_forward_jit.1} parent=0 // pred_check
    _
  $region7: #{_actor_forward_jit.1} parent=0 // pred_check_branch
    %15 = sbr.rel (0) target = $region9
  $region8: #{_actor_forward_jit.1} parent=0 // pred_region
    _
  $region9: #{_actor_forward_jit.1} parent=0 // pred_fallthru
    _
  // Predicated region
  $region10: #{_actor_forward_jit.1} parent=0 // pred_check
    _
  $region11: #{_actor_forward_jit.1} parent=0 // pred_check_branch
    %17 = sbr.rel (0) target = $region13
  $region12: #{_actor_forward_jit.1} parent=0 // pred_region
    _
  $region13: #{_actor_forward_jit.1} parent=0 // pred_fallthru
    _
  // Predicated region
  $region14: #{_actor_forward_jit.1} parent=0 // pred_check
    _
  $region15: #{_actor_forward_jit.1} parent=0 // pred_check_branch
    %19 = sbr.rel (0) target = $region17
  $region16: #{_actor_forward_jit.1} parent=0 // pred_region
    _
  $region17: #{_actor_forward_jit.1} parent=0 // pred_fallthru
    _
  // Predicated region
  $region18: #{_actor_forward_jit.1} parent=0 // pred_check
    _
  $region19: #{_actor_forward_jit.1} parent=0 // pred_check_branch
    %21 = sbr.rel (0) target = $region21
  $region20: #{_actor_forward_jit.1} parent=0 // pred_region
    _
  $region21: #{_actor_forward_jit.1} parent=0 // pred_fallthru
    _
  // Predicated region
  $region22: #{_actor_forward_jit.1} parent=0 // pred_check
    _
  $region23: #{_actor_forward_jit.1} parent=0 // pred_check_branch
    %23 = sbr.rel (0) target = $region25
  $region24: #{_actor_forward_jit.1} parent=0 // pred_region
    _
  $region25: #{_actor_forward_jit.1} parent=0 // pred_fallthru
    _
  // Predicated region
  $region26: #{_actor_forward_jit.1} parent=0 // pred_check
    _
  $region27: #{_actor_forward_jit.1} parent=0 // pred_check_branch
    %25 = sbr.rel (0) target = $region29
  $region28: #{_actor_forward_jit.1} parent=0 // pred_region
    _
  $region29: #{_actor_forward_jit.1} parent=0 // pred_fallthru
    _
  %v27 = vld [vmem:[%s0] sm:$0xff]
  %v28 = vld [vmem:[%s1] sm:$0xf]
  %v29 = vld [vmem:[%s1 + $0x4] sm:$0xf]
  %v30 = vld [vmem:[%s2] sm:$0x1]
  %v31 = vpack.c.bf16 %v27, %v27
  %v33 = vlaneseq
  %v34 = vshrl.u32 %v33, 7
  %v35 = vsub.s32 0, %v34
  %v36 = vrot.slane %v30, %v35
  %v40 = vunpack.c.l.b16 %v28
  %v41 = vunpack.c.l.b16 %v29
  %v42 = vpack.c.b16 %v41, %v40
  %vm44 = vcmask 130048
  %v46 = vsel %vm44, %v31, 0
  %48 = vmatprep.subr.bf16.mxu0 0
  %49 = vmatpush1.bf16.msra.mxu0 0
  %50 = vmatprep.subr.bf16.mxu0 0
  %51 = vmatpush1.bf16.msra.mxu0 0
  %52 = vmatprep.subr.bf16.mxu0 0
  %53 = vmatpush1.bf16.msra.mxu0 0
  %54 = vmatprep.subr.bf16.mxu0 0
  %55 = vmatpush1.bf16.msra.mxu0 0
  %56 = vmatprep.subr.bf16.mxu0 0
  %57 = vmatpush1.bf16.msra.mxu0 0
  %58 = vmatprep.subr.bf16.mxu0 0
  %59 = vmatpush1.bf16.msra.mxu0 0
  %60 = vmatprep.subr.bf16.mxu0 0
  %61 = vmatpush1.bf16.msra.mxu0 0
  %62 = vmatprep.subr.bf16.mxu0 0
  %63 = vmatpush1.bf16.msra.mxu0 %v42
  %64 = vmatprep.subr.bf16.mxu0 0
  %65 = vmatpush2.bf16.msra.mxu0 0
  %66 = vmatprep.subr.bf16.mxu0 0
  %67 = vmatpush2.bf16.msra.mxu0 0
  %68 = vmatprep.subr.bf16.mxu0 0
  %69 = vmatpush2.bf16.msra.mxu0 0
  %70 = vmatprep.subr.bf16.mxu0 0
  %71 = vmatpush2.bf16.msra.mxu0 0
  %72 = vmatprep.subr.bf16.mxu0 0
  %73 = vmatpush2.bf16.msra.mxu0 0
  %74 = vmatprep.subr.bf16.mxu0 0
  %75 = vmatpush2.bf16.msra.mxu0 0
  %76 = vmatprep.subr.bf16.mxu0 0
  %77 = vmatpush2.bf16.msra.mxu0 0
  %78 = vmatprep.subr.bf16.mxu0 0
  %79 = vmatpush2.bf16.msra.mxu0 0
  %80 = vmatprep.mubr.bf16.mxu0 0
  %81 = vmatmul.mubr.bf16.gmra.mxu0 %v46
  %v82 = vpop.f32.mrf.mxu0
  %v83 = vadd.f32 %v36, %v82
  %v84 = vpop.f32.mrf.mxu0
  %v85 = vpop.f32.mrf.mxu0
  %v86 = vpop.f32.mrf.mxu0
  %87 = vdwg.mxu0
  %v88 = vmax.f32 %v83, 0.0
  %v89 = vld [vmem:[%s3] sm:$0xf]
  %v90 = vld [vmem:[%s3 + $0x4] sm:$0xf]
  %v91 = vld [vmem:[%s3 + $0x8] sm:$0xf]
  %v92 = vld [vmem:[%s3 + $0xc] sm:$0xf]
  %v93 = vld [vmem:[%s3 + $0x10] sm:$0xf]
  %v94 = vld [vmem:[%s3 + $0x14] sm:$0xf]
  %v95 = vld [vmem:[%s3 + $0x18] sm:$0xf]
  %v96 = vld [vmem:[%s3 + $0x1c] sm:$0xf]
  %v97 = vld [vmem:[%s3 + $0x20] sm:$0xf]
  %v98 = vld [vmem:[%s3 + $0x24] sm:$0xf]
  %v99 = vld [vmem:[%s3 + $0x28] sm:$0xf]
  %v100 = vld [vmem:[%s3 + $0x2c] sm:$0xf]
  %v101 = vld [vmem:[%s3 + $0x30] sm:$0xf]
  %v102 = vld [vmem:[%s3 + $0x34] sm:$0xf]
  %v103 = vld [vmem:[%s3 + $0x38] sm:$0xf]
  %v104 = vld [vmem:[%s3 + $0x3c] sm:$0xf]
  %v105 = vld [vmem:[%s4] sm:$0x1]
  %v106 = vpack.c.bf16 %v88, %v88
  %v108 = vlaneseq
  %v109 = vshrl.u32 %v108, 7
  %v110 = vsub.s32 0, %v109
  %v111 = vrot.slane %v105, %v110
  %v129 = vunpack.c.l.b16 %v89
  %v130 = vunpack.c.l.b16 %v90
  %v131 = vunpack.c.l.b16 %v91
  %v132 = vunpack.c.l.b16 %v92
  %v133 = vunpack.c.l.b16 %v93
  %v134 = vunpack.c.l.b16 %v94
  %v135 = vunpack.c.l.b16 %v95
  %v136 = vunpack.c.l.b16 %v96
  %v137 = vunpack.c.l.b16 %v97
  %v138 = vunpack.c.l.b16 %v98
  %v139 = vunpack.c.l.b16 %v99
  %v140 = vunpack.c.l.b16 %v100
  %v141 = vunpack.c.l.b16 %v101
  %v142 = vunpack.c.l.b16 %v102
  %v143 = vunpack.c.l.b16 %v103
  %v144 = vunpack.c.l.b16 %v104
  %v145 = vpack.c.b16 %v130, %v129
  %v146 = vpack.c.b16 %v132, %v131
  %v147 = vpack.c.b16 %v134, %v133
  %v148 = vpack.c.b16 %v136, %v135
  %v149 = vpack.c.b16 %v138, %v137
  %v150 = vpack.c.b16 %v140, %v139
  %v151 = vpack.c.b16 %v142, %v141
  %v152 = vpack.c.b16 %v144, %v143
  %161 = vmatprep.subr.bf16.mxu0 0
  %162 = vmatpush1.bf16.msra.mxu0 %v152
  %163 = vmatprep.subr.bf16.mxu0 0
  %164 = vmatpush1.bf16.msra.mxu0 %v151
  %165 = vmatprep.subr.bf16.mxu0 0
  %166 = vmatpush1.bf16.msra.mxu0 %v150
  %167 = vmatprep.subr.bf16.mxu0 0
  %168 = vmatpush1.bf16.msra.mxu0 %v149
  %169 = vmatprep.subr.bf16.mxu0 0
  %170 = vmatpush1.bf16.msra.mxu0 %v148
  %171 = vmatprep.subr.bf16.mxu0 0
  %172 = vmatpush1.bf16.msra.mxu0 %v147
  %173 = vmatprep.subr.bf16.mxu0 0
  %174 = vmatpush1.bf16.msra.mxu0 %v146
  %175 = vmatprep.subr.bf16.mxu0 0
  %176 = vmatpush1.bf16.msra.mxu0 %v145
  %177 = vmatprep.subr.bf16.mxu0 0
  %178 = vmatpush2.bf16.msra.mxu0 0
  %179 = vmatprep.subr.bf16.mxu0 0
  %180 = vmatpush2.bf16.msra.mxu0 0
  %181 = vmatprep.subr.bf16.mxu0 0
  %182 = vmatpush2.bf16.msra.mxu0 0
  %183 = vmatprep.subr.bf16.mxu0 0
  %184 = vmatpush2.bf16.msra.mxu0 0
  %185 = vmatprep.subr.bf16.mxu0 0
  %186 = vmatpush2.bf16.msra.mxu0 0
  %187 = vmatprep.subr.bf16.mxu0 0
  %188 = vmatpush2.bf16.msra.mxu0 0
  %189 = vmatprep.subr.bf16.mxu0 0
  %190 = vmatpush2.bf16.msra.mxu0 0
  %191 = vmatprep.subr.bf16.mxu0 0
  %192 = vmatpush2.bf16.msra.mxu0 0
  %193 = vmatprep.mubr.bf16.mxu0 0
  %194 = vmatmul.mubr.bf16.gmra.mxu0 %v106
  %v195 = vpop.f32.mrf.mxu0
  %v196 = vadd.f32 %v111, %v195
  %v197 = vpop.f32.mrf.mxu0
  %v198 = vpop.f32.mrf.mxu0
  %v199 = vpop.f32.mrf.mxu0
  %200 = vdwg.mxu0
  %v201 = vmax.f32 %v196, 0.0
  %v202 = vld [vmem:[%s5] sm:$0xf]
  %v203 = vld [vmem:[%s5 + $0x4] sm:$0xf]
  %v204 = vld [vmem:[%s5 + $0x8] sm:$0xf]
  %v205 = vld [vmem:[%s5 + $0xc] sm:$0xf]
  %v206 = vld [vmem:[%s5 + $0x10] sm:$0xf]
  %v207 = vld [vmem:[%s5 + $0x14] sm:$0xf]
  %v208 = vld [vmem:[%s5 + $0x18] sm:$0xf]
  %v209 = vld [vmem:[%s5 + $0x1c] sm:$0xf]
  %v210 = vld [vmem:[%s5 + $0x20] sm:$0xf]
  %v211 = vld [vmem:[%s5 + $0x24] sm:$0xf]
  %v212 = vld [vmem:[%s5 + $0x28] sm:$0xf]
  %v213 = vld [vmem:[%s5 + $0x2c] sm:$0xf]
  %v214 = vld [vmem:[%s5 + $0x30] sm:$0xf]
  %v215 = vld [vmem:[%s5 + $0x34] sm:$0xf]
  %v216 = vld [vmem:[%s5 + $0x38] sm:$0xf]
  %v217 = vld [vmem:[%s5 + $0x3c] sm:$0xf]
  %v218 = vld [vmem:[%s6] sm:$0x1]
  %v219 = vpack.c.bf16 %v201, %v201
  %v221 = vlaneseq
  %v222 = vshrl.u32 %v221, 7
  %v223 = vsub.s32 0, %v222
  %v224 = vrot.slane %v218, %v223
  %v242 = vunpack.c.l.b16 %v202
  %v243 = vunpack.c.l.b16 %v203
  %v244 = vunpack.c.l.b16 %v204
  %v245 = vunpack.c.l.b16 %v205
  %v246 = vunpack.c.l.b16 %v206
  %v247 = vunpack.c.l.b16 %v207
  %v248 = vunpack.c.l.b16 %v208
  %v249 = vunpack.c.l.b16 %v209
  %v250 = vunpack.c.l.b16 %v210
  %v251 = vunpack.c.l.b16 %v211
  %v252 = vunpack.c.l.b16 %v212
  %v253 = vunpack.c.l.b16 %v213
  %v254 = vunpack.c.l.b16 %v214
  %v255 = vunpack.c.l.b16 %v215
  %v256 = vunpack.c.l.b16 %v216
  %v257 = vunpack.c.l.b16 %v217
  %v258 = vpack.c.b16 %v243, %v242
  %v259 = vpack.c.b16 %v245, %v244
  %v260 = vpack.c.b16 %v247, %v246
  %v261 = vpack.c.b16 %v249, %v248
  %v262 = vpack.c.b16 %v251, %v250
  %v263 = vpack.c.b16 %v253, %v252
  %v264 = vpack.c.b16 %v255, %v254
  %v265 = vpack.c.b16 %v257, %v256
  %274 = vmatprep.subr.bf16.mxu0 0
  %275 = vmatpush1.bf16.msra.mxu0 %v265
  %276 = vmatprep.subr.bf16.mxu0 0
  %277 = vmatpush1.bf16.msra.mxu0 %v264
  %278 = vmatprep.subr.bf16.mxu0 0
  %279 = vmatpush1.bf16.msra.mxu0 %v263
  %280 = vmatprep.subr.bf16.mxu0 0
  %281 = vmatpush1.bf16.msra.mxu0 %v262
  %282 = vmatprep.subr.bf16.mxu0 0
  %283 = vmatpush1.bf16.msra.mxu0 %v261
  %284 = vmatprep.subr.bf16.mxu0 0
  %285 = vmatpush1.bf16.msra.mxu0 %v260
  %286 = vmatprep.subr.bf16.mxu0 0
  %287 = vmatpush1.bf16.msra.mxu0 %v259
  %288 = vmatprep.subr.bf16.mxu0 0
  %289 = vmatpush1.bf16.msra.mxu0 %v258
  %290 = vmatprep.subr.bf16.mxu0 0
  %291 = vmatpush2.bf16.msra.mxu0 0
  %292 = vmatprep.subr.bf16.mxu0 0
  %293 = vmatpush2.bf16.msra.mxu0 0
  %294 = vmatprep.subr.bf16.mxu0 0
  %295 = vmatpush2.bf16.msra.mxu0 0
  %296 = vmatprep.subr.bf16.mxu0 0
  %297 = vmatpush2.bf16.msra.mxu0 0
  %298 = vmatprep.subr.bf16.mxu0 0
  %299 = vmatpush2.bf16.msra.mxu0 0
  %300 = vmatprep.subr.bf16.mxu0 0
  %301 = vmatpush2.bf16.msra.mxu0 0
  %302 = vmatprep.subr.bf16.mxu0 0
  %303 = vmatpush2.bf16.msra.mxu0 0
  %304 = vmatprep.subr.bf16.mxu0 0
  %305 = vmatpush2.bf16.msra.mxu0 0
  %306 = vmatprep.mubr.bf16.mxu0 0
  %307 = vmatmul.mubr.bf16.gmra.mxu0 %v219
  %v308 = vpop.f32.mrf.mxu0
  %v309 = vadd.f32 %v224, %v308
  %v310 = vpop.f32.mrf.mxu0
  %v311 = vpop.f32.mrf.mxu0
  %v312 = vpop.f32.mrf.mxu0
  %313 = vdwg.mxu0
  %v314 = vtanh.pop %v309
  %315 = vst [vmem:[%s7] sm:$0xff] %v314
  // Predicated region
  $region30: #{_actor_forward_jit.1} parent=0 // pred_check
    _
  $region31: #{_actor_forward_jit.1} parent=0 // pred_check_branch
    %317 = sbr.rel (0) target = $region33
  $region32: #{_actor_forward_jit.1} parent=0 // pred_region
    _
  $region33: #{_actor_forward_jit.1} parent=0 // pred_fallthru
    _
  // Predicated region
  $region34: #{_actor_forward_jit.1} parent=0 // pred_check
    _
  $region35: #{_actor_forward_jit.1} parent=0 // pred_check_branch
    %319 = sbr.rel (0) target = $region37
  $region36: #{_actor_forward_jit.1} parent=0 // pred_region
    _
  $region37: #{_actor_forward_jit.1} parent=0 // pred_fallthru
    _

</llo_original>
